<compile_context>
chip_gen: v6e
topology: v6e:2x2x1
jax: 0.10.0
libtpu: 0.0.40
codegen_flags: <defaults>
</compile_context>

<pallas_src>
import jax
import jax.numpy as jnp
from jax.experimental import pallas as pl
from jax.experimental.pallas import tpu as pltpu


def _sin_kernel(x_ref, amp_ref, freq_ref, phase_ref, o_ref):
    # x_ref: (tile_b, tile_f); params: (1, tile_f) -> cheap sublane broadcast
    # over rows inside the kernel (never pre-broadcast to (B, F) in HBM).
    # Single fused VPU expression: mul + add + sin-polynomial + mul.
    o_ref[...] = amp_ref[...] * jnp.sin(freq_ref[...] * x_ref[...] + phase_ref[...])


def _round_up(x, m):
    return ((x + m - 1) // m) * m


def _fit_tile(dim, max_tile, align):
    """Aligned tile size that minimizes padding waste, capped at max_tile.

    e.g. dim=640, max=1024, align=128 -> 640 (no waste) instead of 1024.
    """
    if dim <= max_tile:
        return _round_up(dim, align)
    n_blocks = pl.cdiv(dim, max_tile)
    return _round_up(pl.cdiv(dim, n_blocks), align)


def sin_module_forward(x, amp, freq, phase, *, min_kernel_elements=1 << 20):
    """Pallas implementation of Sin.forward.

    x:                (B, F) float32
    amp, freq, phase: (F,)   float32, broadcast over the batch axis
    returns           (B, F) float32
    """
    B, F = x.shape
    dtype = x.dtype

    # ---- Small-input fallback --------------------------------------------
    # pallas_call fixed overhead dominates tiny shapes; plain fused XLA is
    # faster there at zero cost to the big-shape path.
    if B * F < min_kernel_elements:
        return (amp * jnp.sin(freq * x + phase)).astype(dtype)

    # ---- Tile plan (memory-bound elementwise kernel) ---------------------
    # * Lane axis (last dim) in multiples of 128 -> lane-dense vector stores.
    # * 512x1024 f32 tiles: double-buffered in+out working set is ~8 MiB,
    #   inside v5e's 16 MiB default scoped VMEM and far inside v6e/v7x
    #   budgets, while 512/1024-wide tiles sit at ~85% of HBM roofline.
    # * tile_f widened preferentially (lane axis); tile sizes chosen to
    #   minimize padded lanes/rows at awkward B/F.
    # * Both grid axes are independent -> "parallel" so v7x can shard the
    #   grid across its two TensorCores.
    LANE, SUBLANE = 128, 8
    MAX_TILE_B, MAX_TILE_F = 512, 1024

    tile_f = _fit_tile(F, MAX_TILE_F, LANE)
    tile_b = _fit_tile(B, MAX_TILE_B, SUBLANE)
    n_f = pl.cdiv(F, tile_f)
    n_b = pl.cdiv(B, tile_b)

    # x and the output are NOT padded in HBM (no extra full-array pad/slice
    # passes): the cdiv grid lets Pallas mask the ragged tail blocks on both
    # the input DMA and the output writeback. Only the tiny (1, F) parameter
    # rows are explicitly padded so every (1, tile_f) param block is aligned.
    f_pad = n_f * tile_f
    amp_p = jnp.pad(amp.reshape(1, F), ((0, 0), (0, f_pad - F)))
    freq_p = jnp.pad(freq.reshape(1, F), ((0, 0), (0, f_pad - F)))
    phase_p = jnp.pad(phase.reshape(1, F), ((0, 0), (0, f_pad - F)))

    # Grid order (feature, batch): batch is the innermost (fastest) axis, so
    # the param block index (0, j) is constant across the inner loop and
    # amp/freq/phase stay VMEM-resident instead of being re-DMA'd per step.
    grid = (n_f, n_b)

    return pl.pallas_call(
        _sin_kernel,
        out_shape=jax.ShapeDtypeStruct((B, F), dtype),
        grid_spec=pltpu.PrefetchScalarGridSpec(
            num_scalar_prefetch=0,
            grid=grid,
            in_specs=[
                pl.BlockSpec((tile_b, tile_f), lambda j, i: (i, j)),
                pl.BlockSpec((1, tile_f), lambda j, i: (0, j)),
                pl.BlockSpec((1, tile_f), lambda j, i: (0, j)),
                pl.BlockSpec((1, tile_f), lambda j, i: (0, j)),
            ],
            out_specs=pl.BlockSpec((tile_b, tile_f), lambda j, i: (i, j)),
        ),
        compiler_params=pltpu.CompilerParams(
            dimension_semantics=("parallel", "parallel"),
            # Explicit headroom: raises v5e's 16 MiB default, matches the
            # v6e/v7x defaults, well under v7x's 64 MiB physical VMEM.
            vmem_limit_bytes=32 << 20,
        ),
    )(x, amp_p, freq_p, phase_p)


if __name__ == "__main__":
    key = jax.random.PRNGKey(0)
    kx, ka, kf, kp = jax.random.split(key, 4)

    B, F = 8, 32  # small test shapes: batch=8, size=32

    x = jax.random.normal(kx, (B, F), dtype=jnp.float32)
    # Deterministic parameter init matching nn.init.normal_ statistics:
    # amp ~ N(1, 0.01), freq ~ N(1, 0.01), phase ~ N(0, 0.01)
    amp = 1.0 + 0.01 * jax.random.normal(ka, (F,), dtype=jnp.float32)
    freq = 1.0 + 0.01 * jax.random.normal(kf, (F,), dtype=jnp.float32)
    phase = 0.01 * jax.random.normal(kp, (F,), dtype=jnp.float32)

    # Force the Pallas kernel path even at this tiny test shape so the
    # kernel itself is exercised (ragged lane tail: F=32 < 128).
    out = sin_module_forward(x, amp, freq, phase, min_kernel_elements=0)
    jax.block_until_ready(out)

    # Correctness check against pure-JAX reference.
    ref = amp[None, :] * jnp.sin(freq[None, :] * x + phase[None, :])
    assert out.shape == (B, F)
    assert jnp.allclose(out, ref, atol=1e-5, rtol=1e-5)

    # Also exercise the small-input XLA fallback dispatch path.
    out_fb = sin_module_forward(x, amp, freq, phase)
    jax.block_until_ready(out_fb)
    assert jnp.allclose(out_fb, ref, atol=1e-5, rtol=1e-5)

    print("KERNEL_OK")
</pallas_src>

<mosaic_0001>
module attributes {stable_mosaic.version = 11 : i64} {
  func.func @_sin_kernel(%arg0: i32, %arg1: i32, %arg2: memref<8x128xf32, #tpu.memory_space<vmem>>, %arg3: memref<1x128xf32, #tpu.memory_space<vmem>>, %arg4: memref<1x128xf32, #tpu.memory_space<vmem>>, %arg5: memref<1x128xf32, #tpu.memory_space<vmem>>, %arg6: memref<8x128xf32, #tpu.memory_space<vmem>>) attributes {dimension_semantics = [#tpu.dimension_semantics<parallel>, #tpu.dimension_semantics<parallel>], iteration_bounds = array<i64: 1, 1>, scalar_prefetch = 0 : i64, scratch_operands = 0 : i64, tpu.core_type = #tpu.core_type<tc>, window_params = [{transform_indices = @transform_0, window_bounds = array<i64: 8, 128>}, {transform_indices = @transform_1, window_bounds = array<i64: 1, 128>}, {transform_indices = @transform_2, window_bounds = array<i64: 1, 128>}, {transform_indices = @transform_3, window_bounds = array<i64: 1, 128>}, {transform_indices = @transform_4, window_bounds = array<i64: 8, 128>}]} {
    %c0 = arith.constant 0 : index
    %c0_0 = arith.constant 0 : index
    %0 = vector.load %arg3[%c0, %c0_0] : memref<1x128xf32, #tpu.memory_space<vmem>>, vector<1x128xf32>
    %c0_1 = arith.constant 0 : index
    %c0_2 = arith.constant 0 : index
    %1 = vector.load %arg4[%c0_1, %c0_2] : memref<1x128xf32, #tpu.memory_space<vmem>>, vector<1x128xf32>
    %c0_3 = arith.constant 0 : index
    %c0_4 = arith.constant 0 : index
    %2 = vector.load %arg2[%c0_3, %c0_4] : memref<8x128xf32, #tpu.memory_space<vmem>>, vector<8x128xf32>
    %3 = vector.broadcast %1 : vector<1x128xf32> to vector<8x128xf32>
    %4 = arith.mulf %3, %2 : vector<8x128xf32>
    %c0_5 = arith.constant 0 : index
    %c0_6 = arith.constant 0 : index
    %5 = vector.load %arg5[%c0_5, %c0_6] : memref<1x128xf32, #tpu.memory_space<vmem>>, vector<1x128xf32>
    %6 = vector.broadcast %5 : vector<1x128xf32> to vector<8x128xf32>
    %7 = arith.addf %4, %6 : vector<8x128xf32>
    %8 = math.sin %7 : vector<8x128xf32>
    %9 = vector.broadcast %0 : vector<1x128xf32> to vector<8x128xf32>
    %10 = arith.mulf %9, %8 : vector<8x128xf32>
    %c0_7 = arith.constant 0 : index
    %c0_8 = arith.constant 0 : index
    %11 = vector.load %arg6[%c0_7, %c0_8] : memref<8x128xf32, #tpu.memory_space<vmem>>, vector<8x128xf32>
    tpu.vector_store %arg6[%c0_7, %c0_8], %10 {strides = array<i32>} : memref<8x128xf32, #tpu.memory_space<vmem>>, vector<8x128xf32>,
    return
  }
  func.func @transform_0(%arg0: i32, %arg1: i32) -> (i32, i32) {
    %c0_i32 = arith.constant 0 : i32
    return %arg1, %arg0 : i32, i32
  }
  func.func @transform_1(%arg0: i32, %arg1: i32) -> (i32, i32) {
    %c0_i32 = arith.constant 0 : i32
    %c0_i32_0 = arith.constant 0 : i32
    return %c0_i32, %arg0 : i32, i32
  }
  func.func @transform_2(%arg0: i32, %arg1: i32) -> (i32, i32) {
    %c0_i32 = arith.constant 0 : i32
    %c0_i32_0 = arith.constant 0 : i32
    return %c0_i32, %arg0 : i32, i32
  }
  func.func @transform_3(%arg0: i32, %arg1: i32) -> (i32, i32) {
    %c0_i32 = arith.constant 0 : i32
    %c0_i32_0 = arith.constant 0 : i32
    return %c0_i32, %arg0 : i32, i32
  }
  func.func @transform_4(%arg0: i32, %arg1: i32) -> (i32, i32) {
    %c0_i32 = arith.constant 0 : i32
    return %arg1, %arg0 : i32, i32
  }
}

</mosaic_0001>

<llo_original>
// kernel: tpu_custom_call.1
$region0: #{tpu_custom_call.1}
  #allocation0 [shape = 'u32[]', space=smem, size = 0x4, offset = 0x4, fixed_abs, tag = 'smem constant byte address 0x4 - core index']
  #allocation1 [shape = 'u32[144,128]{1,0:T(1,128)}', space=vmem, size = 0x12000, scoped, tag = 'internal scratch']
  %s0 = inlined_call_operand.hbm [shape: f32[8,32], index: 0, kind: input, shape index: {}]
  %s1 = inlined_call_operand.vmem [shape: f32[1,128], index: 1, kind: input, shape index: {}]
  %s2 = inlined_call_operand.vmem [shape: f32[1,128], index: 2, kind: input, shape index: {}]
  %s3 = inlined_call_operand.vmem [shape: f32[1,128], index: 3, kind: input, shape index: {}]
  %s4 = inlined_call_operand.hbm [shape: f32[8,32], index: 4, kind: output, shape index: {}]
  %s5 = sld [smem:[#allocation0]]
  $region30: #{tpu_custom_call.1} parent=0
    _
  %s7 = ssub.s32 1, %s5
  %s8 = scalar_select 0, %s7, %s5
  $region1: #{tpu_custom_call.1} parent=0
    #allocation2 [shape = 'u8[4096]{0}', space=vmem, size = 0x1000, scoped, tag = 'input window, operand 0, single buffered']
    #allocation3 [shape = 's32[1]{0}', space=sflag, size = 0x4, scoped, tag = 'scoped memory for tpu_custom_call.1']
    #allocation4 [shape = 's32[1]{0}', space=sflag, size = 0x4, scoped, tag = 'scoped memory for tpu_custom_call.1']
    #allocation5 [shape = 'u8[4096]{0}', space=vmem, size = 0x1000, scoped, tag = 'output window, operand 0, single buffered']
    %9 = vsyncpa [#allocation3], 0
    %10 = vsyncpa [#allocation4], 0
    // Predicated region
    $region2: #{tpu_custom_call.1} parent=1 // pred_check
      _
    $region3: #{tpu_custom_call.1} parent=1 // pred_check_branch
      %12 = sbr.rel (0) target = $region5
    $region4: #{tpu_custom_call.1} parent=1 // pred_region
      %s14 = ssub.s32 128, 128
      %15 = vsyncadd [#allocation3], %s14
      %s17 = sshll.u32 [#allocation2], 4
      %s18 = int_to_ptr.vmem [resolvable:$true] %s17
      %20 = dma.hbm_to_vmem [thread:$0]  %s0, 128, %s18, [#allocation3]
    $region5: #{tpu_custom_call.1} parent=1 // pred_fallthru
      _
    // Predicated region
    $region6: #{tpu_custom_call.1} parent=1 // pred_check
      _
    $region7: #{tpu_custom_call.1} parent=1 // pred_check_branch
      %22 = sbr.rel (0) target = $region9
    $region8: #{tpu_custom_call.1} parent=1 // pred_region
      _
    $region9: #{tpu_custom_call.1} parent=1 // pred_fallthru
      _
    // Predicated region
    $region10: #{tpu_custom_call.1} parent=1 // pred_check
      _
    $region11: #{tpu_custom_call.1} parent=1 // pred_check_branch
      %24 = sbr.rel (0) target = $region13
    $region12: #{tpu_custom_call.1} parent=1 // pred_region
      _
    $region13: #{tpu_custom_call.1} parent=1 // pred_fallthru
      _
    // Predicated region
    $region14: #{tpu_custom_call.1} parent=1 // pred_check
      _
    $region15: #{tpu_custom_call.1} parent=1 // pred_check_branch
      %26 = sbr.rel (0) target = $region17
    $region16: #{tpu_custom_call.1} parent=1 // pred_region
      _
    $region17: #{tpu_custom_call.1} parent=1 // pred_fallthru
      _
    // Predicated region
    $region18: #{tpu_custom_call.1} parent=1 // pred_check
      _
    $region19: #{tpu_custom_call.1} parent=1 // pred_check_branch
      %28 = sbr.rel (0) target = $region21
    $region20: #{tpu_custom_call.1} parent=1 // pred_region
      %29 = dma.done [#allocation3], 128
    $region21: #{tpu_custom_call.1} parent=1 // pred_fallthru
      _
    %v30 = vld [vmem:[%s1] sm:$0x1]
    %v31 = vld [vmem:[%s2] sm:$0x1]
    %v32 = vld [vmem:[#allocation2] sm:$0xff]
    %v34 = vlaneseq
    %v35 = vshrl.u32 %v34, 7
    %v36 = vsub.s32 0, %v35
    %v37 = vrot.slane %v31, %v36
    %v39 = vmul.f32 %v37, %v32
    %v40 = vld [vmem:[%s3] sm:$0x1]
    %v42 = vlaneseq
    %v43 = vshrl.u32 %v42, 7
    %v44 = vsub.s32 0, %v43
    %v45 = vrot.slane %v40, %v44
    %v47 = vadd.f32 %v39, %v45
    %v48 = vand.u32 2147483647, %v47
    %vm49 = vcmp.le.f32.partialorder %v48, 0.7853982
    %vm50 = vcmp.lt.s32.totalorder %v47, 0
    %v51 = vand.u32 %v47, 2139095040
    %v52 = vshrl.u32 %v51, 23
    %v53 = vsub.s32 %v52, 127
    %v54 = vand.u32 2147483647, %v47
    %v55 = vand.u32 %v54, 8388607
    %v56 = vor.u32 %v55, 8388608
    %v57 = vsub.s32 0, %v56
    %v58 = vadd.s32 %v53, 1
    %vm59 = vcmp.gt.s32.totalorder %v58, 0
    %v60 = vsel %vm59, %v58, 0
    %v61 = vshrl.u32 %v60, 5
    %v62 = vand.u32 %v60, 31
    %v63 = vsub.s32 32, %v62
    %v64 = vshrl.u32 683565275, %v63
    %v65 = vshll.u32 683565275, %v62
    %v66 = vshrl.u32 2475754826, %v63
    %v67 = vor.u32 %v65, %v66
    %v68 = vshll.u32 2475754826, %v62
    %v69 = vshrl.u32 2131351028, %v63
    %v70 = vor.u32 %v68, %v69
    %v71 = vshll.u32 2131351028, %v62
    %v72 = vshrl.u32 2102212464, %v63
    %v73 = vor.u32 %v71, %v72
    %v74 = vshll.u32 2102212464, %v62
    %v75 = vshrl.u32 920167782, %v63
    %v76 = vor.u32 %v74, %v75
    %v77 = vshll.u32 920167782, %v62
    %v78 = vshrl.u32 1326507024, %v63
    %v79 = vor.u32 %v77, %v78
    %vm80 = vcmp.lt.s32.totalorder %v61, 1
    %vm81 = vcmp.lt.s32.totalorder %v61, 2
    %vm82 = vcmp.lt.s32.totalorder %v61, 3
    %vm83 = vcmp.lt.s32.totalorder %v61, 4
    %v84 = vsel %vm80, %v64, %v67
    %v85 = vsel %vm83, %v73, 2102212464
    %v86 = vsel %vm82, %v70, %v85
    %v87 = vsel %vm81, %v84, %v86
    %v88 = vsel %vm80, %v67, %v70
    %v89 = vsel %vm83, %v76, 920167782
    %v90 = vsel %vm82, %v73, %v89
    %v91 = vsel %vm81, %v88, %v90
    %v92 = vsel %vm80, %v70, %v73
    %v93 = vsel %vm83, %v79, 1326507024
    %v94 = vsel %vm82, %v76, %v93
    %v95 = vsel %vm81, %v92, %v94
    %v96 = vshll.u32 %v56, 8
    %v97 = vmul.u32.u64.compose %v96, %v95
    %v98 = vextract.low.u32 %v97
    %v99 = vextract.high.u32 %v97
    %v100 = vmul.u32.u64.compose %v96, %v91
    %v101 = vextract.low.u32 %v100
    %v102 = vextract.high.u32 %v100
    %v103 = vmul.u32 %v96, %v87
    %v104 = vadd.s32 %v99, %v101
    %vm105 = vc.u32 %v99, %v101
    %v106 = vadd.s32 %v102, 1
    %v107 = vsel %vm105, %v106, %v102
    %v108 = vadd.s32 %v103, %v107
    %v109 = vadd.s32 %v108, 536870912
    %v110 = vshrl.u32 %v109, 30
    %v111 = vshll.u32 %v110, 30
    %v112 = vsub.s32 %v108, %v111
    %vm113 = vcmp.lt.s32.totalorder %v112, 0
    %v114 = vsub.s32 0, %v112
    %v115 = vsel %vm113, %v114, %v112
    %v116 = vclz %v115
    %v117 = vsub.s32 %v116, 2
    %vm118 = vcmp.gt.s32.totalorder 0, %v117
    %v119 = vsel %vm118, 0, %v117
    %v120 = vsub.s32 32, %v119
    %v121 = vshll.u32 %v112, %v119
    %v122 = vshrl.u32 %v104, %v120
    %v123 = vor.u32 %v121, %v122
    %v124 = vsub.s32 4294967266, %v119
    %v125 = vadd.s32 %v124, 127
    %v126 = vshll.u32 %v125, 23
    %v127 = vor.u32 4788187, %v126
    %v128 = vand.u32 2147483647, %v127
    %v130 = vcvt.s32.f32 %v123
    %v131 = vmul.f32 %v130, %v128
    %v132 = vxor.u32 %v131, 2147483648
    %v133 = vsel %vm50, %v132, %v131
    %v134 = vsub.s32 4, %v110
    %v135 = vsel %vm50, %v134, %v110
    %v136 = vsel %vm49, %v47, %v133
    %v137 = vsel %vm49, 0, %v135
    %v138 = vcosq.f32.pop %v136
    %v139 = vsinq.f32.pop %v136
    %vm140 = vweird.f32 %v47
    %v141 = vadd.s32 %v137, 3
    %v142 = vand.u32 %v141, 3
    %vm143 = vcmp.lt.s32.totalorder %v142, 2
    %vm144 = vcmp.eq.s32.totalorder %v142, 0
    %v145 = vxor.u32 %v139, 2147483648
    %v146 = vsel %vm144, %v138, %v145
    %vm147 = vcmp.eq.s32.totalorder %v142, 2
    %v148 = vxor.u32 %v138, 2147483648
    %v149 = vsel %vm147, %v148, %v139
    %v150 = vsel %vm143, %v146, %v149
    %v151 = vsel %vm140, nan, %v150
    %v153 = vlaneseq
    %v154 = vshrl.u32 %v153, 7
    %v155 = vsub.s32 0, %v154
    %v156 = vrot.slane %v30, %v155
    %v158 = vmul.f32 %v156, %v151
    %159 = vst [vmem:[#allocation5] sm:$0xff] %v158
    // Predicated region
    $region22: #{tpu_custom_call.1} parent=1 // pred_check
      _
    $region23: #{tpu_custom_call.1} parent=1 // pred_check_branch
      %161 = sbr.rel (0) target = $region25
    $region24: #{tpu_custom_call.1} parent=1 // pred_region
      %s163 = ssub.s32 128, 128
      %164 = vsyncadd [#allocation4], %s163
      %s166 = sshll.u32 [#allocation5], 4
      %s167 = int_to_ptr.vmem [resolvable:$true] %s166
      %169 = dma.vmem_to_hbm [thread:$0]  %s167, 128, %s4, [#allocation4]
    $region25: #{tpu_custom_call.1} parent=1 // pred_fallthru
      _
    // Predicated region
    $region26: #{tpu_custom_call.1} parent=1 // pred_check
      _
    $region27: #{tpu_custom_call.1} parent=1 // pred_check_branch
      %171 = sbr.rel (0) target = $region29
    $region28: #{tpu_custom_call.1} parent=1 // pred_region
      %172 = dma.done [#allocation4], 128
    $region29: #{tpu_custom_call.1} parent=1 // pred_fallthru
      _
    %173 = vsyncpa [#allocation3], 1
    %174 = vsyncpa [#allocation4], 1

</llo_original>
